<compile_context>
chip_gen: v7x
topology: tpu7x:2x2x1
jax: 0.10.0
libtpu: 0.0.40
codegen_flags: <defaults>
</compile_context>

<pallas_src>
import functools

import numpy as np
import jax
import jax.numpy as jnp
from jax import lax
from jax.experimental import pallas as pl
from jax.experimental.pallas import tpu as pltpu


# ----------------------------------------------------------------------------
# "Continuous" (analog) filter bank: first-order low-pass prototypes.
# Deterministic parameter init (geomspace of cutoff frequencies).
# ----------------------------------------------------------------------------
class ContinuousLowpassFilters:
    def __init__(self, n_filters, min_cutoff_hz=200.0, max_cutoff_hz=4000.0):
        self.n_filters = n_filters
        self.cutoffs = (2.0 * np.pi) * jnp.geomspace(
            min_cutoff_hz, max_cutoff_hz, n_filters
        ).astype(jnp.float32)  # angular cutoff frequencies [rad/s]

    def get_frequency_responses(self, ang_freqs):
        # H(jw) = 1 / (1 + j w/wc)  ->  real, imag parts, shape (n_filters, M)
        x = ang_freqs[None, :] / self.cutoffs[:, None]
        denom = 1.0 + x * x
        return 1.0 / denom, -x / denom


def compute_hilbert_transforms_of_filters(filters):
    # jnp equivalent of the torch>=1.7 branch (rfft/irfft, norm='ortho')
    n = filters.shape[1]
    ft = jnp.fft.rfft(filters, n=n, axis=1, norm="ortho")
    hft = ft.imag + 1j * (-ft.real)
    return jnp.fft.irfft(hft, n=n, axis=1, norm="ortho").reshape(filters.shape)


# ----------------------------------------------------------------------------
# Frequency-response-sampling FIR design.
# TODO(synk): the one-time FIR design math (jnp.linalg.pinv fit, rfft/irfft
# Hilbert pairs) has no useful Pallas equivalent (tiny, setup-only); it stays
# in plain JAX and only the conv_transpose1d data plane runs in the kernel.
# ----------------------------------------------------------------------------
class FreqRespSampConvTranspose1d:
    def __init__(self, in_channels, out_channels, n_samples,
                 filter_params=None, use_Hilbert_transforms=False):
        self.in_channels = in_channels
        self.out_channels = out_channels
        self.n_samples = n_samples
        self.use_Hilbert_transforms = use_Hilbert_transforms
        n_filters = in_channels * out_channels
        if use_Hilbert_transforms:
            assert n_filters % 2 == 0
            n_filters //= 2
        filter_params = filter_params or {}
        self.continuous_filters = ContinuousLowpassFilters(
            n_filters=n_filters, **filter_params)

    def prepare(self, sample_rate, kernel_size, stride,
                padding=None, output_padding=0):
        self.sample_rate = sample_rate
        self.kernel_size = int(kernel_size)
        self.stride = int(stride)
        self.padding = ((kernel_size - stride) // 2 if padding is None
                        else int(padding))
        self.output_padding = int(output_padding)

    def _compute_pinvW(self):
        K = self.kernel_size
        M = self.n_samples
        sr = float(self.sample_rate)
        nyquist = sr / 2.0
        ang_freqs = jnp.linspace(0.0, nyquist * 2.0 * np.pi, M).astype(jnp.float32)
        norm_w = ang_freqs / sr
        P = (K - 1) // 2 if K % 2 == 1 else K // 2
        if K % 2 == 1:
            seq_P = jnp.arange(-P, P + 1, dtype=jnp.float32)[None, :]
        else:
            seq_P = jnp.arange(-(P - 1), P + 1, dtype=jnp.float32)[None, :]
        ln_W = -norm_w[:, None] * seq_P                              # (M, K)
        W = jnp.concatenate((jnp.cos(ln_W), jnp.sin(ln_W)), axis=0)  # (2M, K)
        pinvW = jnp.linalg.pinv(W)                                   # (K, 2M)
        return ang_freqs, pinvW

    def approximate_by_FIR(self):
        ang_freqs, pinvW = self._compute_pinvW()
        resp_r, resp_i = self.continuous_filters.get_frequency_responses(ang_freqs)
        resp = jnp.concatenate((resp_r, resp_i), axis=1)             # (nf, 2M)
        fir = (pinvW[None, :, :] @ resp[:, :, None])[:, :, 0]        # (nf, K)
        return fir[:, ::-1]                                          # time-reversed

    def weights(self):
        filters = self.approximate_by_FIR()
        if self.use_Hilbert_transforms:
            filters = jnp.concatenate(
                (filters, compute_hilbert_transforms_of_filters(filters)), axis=0)
        # transposed conv weight layout: (in_channels, out_channels, K)
        return filters.reshape(self.in_channels, self.out_channels, -1)

    def forward(self, x):
        return conv_transpose1d_pallas(
            x, self.weights(), self.stride, self.padding, self.output_padding)


# ----------------------------------------------------------------------------
# Pallas kernel: polyphase conv_transpose1d, time on lanes.
#   y[b, co, m*S + r] = sum_{ci, j} x[b, ci, m + off_r - j] * w[ci, co, q_r + j*S]
# with q_r = (r+p) mod S, off_r = (r+p) // S, and x zero outside [0, T).
# ----------------------------------------------------------------------------
def _convt_poly_kernel(w_ref, x_ref, o_ref, *, S, J, K, C_in, C_out, TM,
                       q, off, off_min):
    # w_ref: (C_out, S*J*C_in)  phase sub-filter columns               [VMEM]
    # x_ref: (1, 1, C_in, TW)   halo'd input tile, time on lanes       [VMEM]
    # o_ref: (1, S, C_out, TM)  per-phase outputs, time on lanes       [VMEM]
    for r in range(S):                      # static unroll: output phases
        acc = jnp.zeros((C_out, TM), jnp.float32)
        for j in range(J):                  # static unroll: taps of this phase
            k = q[r] + j * S
            if k >= K:
                continue                    # phase has fewer taps than J
            # static lane offset into the halo tile (no sublane relayouts)
            start = (off[r] - off_min) + (J - 1 - j)
            xs = x_ref[0, 0, :, start:start + TM]          # (C_in, TM)
            for ci in range(C_in):          # static unroll: input channels
                col = (r * J + j) * C_in + ci
                w_col = w_ref[:, col:col + 1]              # (C_out, 1)
                # VPU broadcast FMA over a lane-dense (C_out, TM) slab
                acc = acc + w_col * xs[ci:ci + 1, :]
        o_ref[0, r, :, :] = acc


def _round_up(x, m):
    return ((x + m - 1) // m) * m


def conv_transpose1d_pallas(x, weight, stride, padding, output_padding, *,
                            tm_max=512):
    """x: (B, C_in, T) NCL; weight: (C_in, C_out, K). Returns (B, C_out, T_out) f32."""
    B, C_in, T = map(int, x.shape)
    _, C_out, K = map(int, weight.shape)
    S, p, op = int(stride), int(padding), int(output_padding)
    T_out = (T - 1) * S - 2 * p + K + op
    assert T_out > 0, "invalid conv_transpose1d geometry"

    # ---- polyphase parameters (all static Python ints) ----
    J = -(-K // S)                                   # max taps per phase
    q = [(r + p) % S for r in range(S)]              # first tap index per phase
    off = [(r + p) // S for r in range(S)]           # input offset per phase
    off_min, off_max = min(off), max(off)

    # ---- lane-dense time tiling (per-phase output samples) ----
    M_need = -(-T_out // S)                          # outputs per phase
    TM = min(_round_up(max(1, int(tm_max)), 128), _round_up(M_need, 128))
    n_tiles = -(-M_need // TM)
    M_pad = n_tiles * TM
    halo = (J - 1) + (off_max - off_min)             # small: ~ceil(K/S)
    TW = TM + halo

    # ---- input: tiny boundary pad + halo-tiled view (NO S-x zero-dilation) ----
    # Handles arbitrary padding (incl. padding > K-1) without negative pads.
    L = max(0, (J - 1) - off_min)
    R = max(0, M_pad + off_max - T)
    # Keeping f32 for exact parity with the f32 reference; bf16 input tiles with
    # f32 accumulation would halve HBM traffic on v6e/v7x if tolerances allow.
    x_pad = jnp.pad(x.astype(jnp.float32), ((0, 0), (0, 0), (L, R)))
    base0 = off_min - (J - 1) + L                    # >= 0 by construction
    # One input-sized copy; duplication is only the halo (<< TM per tile).
    x_tiles = jnp.stack(
        [lax.slice_in_dim(x_pad, base0 + i * TM, base0 + i * TM + TW, axis=2)
         for i in range(n_tiles)], axis=1)           # (B, n_tiles, C_in, TW)

    # ---- per-phase sub-filters, laid out as (C_out, S*J*C_in) columns ----
    k_idx = np.array([[q[r] + j * S for j in range(J)] for r in range(S)])
    valid = (k_idx < K)
    w_t = jnp.transpose(weight.astype(jnp.float32), (2, 0, 1))       # (K, C_in, C_out)
    wsub = w_t[np.where(valid, k_idx, 0)]                            # (S, J, C_in, C_out)
    wsub = wsub * jnp.asarray(valid, jnp.float32)[:, :, None, None]
    N_f = S * J * C_in
    w_cols = jnp.transpose(wsub, (3, 0, 1, 2)).reshape(C_out, N_f)   # (C_out, N_f)

    kernel = functools.partial(
        _convt_poly_kernel, S=S, J=J, K=K, C_in=C_in, C_out=C_out, TM=TM,
        q=tuple(q), off=tuple(off), off_min=off_min)

    out = pl.pallas_call(
        kernel,
        out_shape=jax.ShapeDtypeStruct((B, S, C_out, M_pad), jnp.float32),
        grid=(B, n_tiles),
        in_specs=[
            pl.BlockSpec((C_out, N_f), lambda b, i: (0, 0)),            # weights (stay resident)
            pl.BlockSpec((1, 1, C_in, TW), lambda b, i: (b, i, 0, 0)),  # halo'd input tile
        ],
        out_specs=pl.BlockSpec((1, S, C_out, TM), lambda b, i: (b, 0, 0, i)),
        compiler_params=pltpu.CompilerParams(
            dimension_semantics=("parallel", "parallel"),
            vmem_limit_bytes=32 * 1024 * 1024),
        cost_estimate=pl.CostEstimate(
            flops=2 * B * T_out * C_in * C_out * J,
            transcendentals=0,
            bytes_accessed=4 * (B * n_tiles * C_in * TW
                                + B * S * C_out * M_pad + C_out * N_f)),
    )(w_cols, x_tiles)

    # interleave the S phases: y[b, co, m*S + r] = out[b, r, co, m]
    y = jnp.transpose(out, (0, 2, 3, 1)).reshape(B, C_out, M_pad * S)
    return y[:, :, :T_out]


# ----------------------------------------------------------------------------
# Reference (plain JAX) for self-check: same math via conv_general_dilated
# ----------------------------------------------------------------------------
def conv_transpose1d_ref(x, weight, stride, padding, output_padding):
    C_in, C_out, K = weight.shape
    w_corr = jnp.transpose(weight, (1, 0, 2))[:, :, ::-1]  # (C_out, C_in, K)
    lpad = K - 1 - padding
    return lax.conv_general_dilated(
        x.astype(jnp.float32), w_corr.astype(jnp.float32),
        window_strides=(1,), padding=[(lpad, lpad + output_padding)],
        lhs_dilation=(stride,), rhs_dilation=(1,),
        dimension_numbers=("NCH", "OIH", "NCH"))


if __name__ == "__main__":
    key = jax.random.PRNGKey(0)
    k1, k2, k3 = jax.random.split(key, 3)

    # --- test 1: original config (odd kernel, stride 2, default padding) ---
    B, C_in, C_out, T = 2, 4, 3, 16
    layer = FreqRespSampConvTranspose1d(
        in_channels=C_in, out_channels=C_out, n_samples=64,
        filter_params=dict(min_cutoff_hz=200.0, max_cutoff_hz=4000.0),
        use_Hilbert_transforms=False)
    layer.prepare(sample_rate=16000, kernel_size=9, stride=2)
    x1 = jax.random.normal(k1, (B, C_in, T), dtype=jnp.float32)
    out1 = jax.block_until_ready(layer.forward(x1))
    ref1 = jax.block_until_ready(conv_transpose1d_ref(
        x1, layer.weights(), layer.stride, layer.padding, layer.output_padding))
    assert out1.shape == (B, C_out, (T - 1) * 2 - 2 * 3 + 9), out1.shape
    assert np.allclose(np.asarray(out1), np.asarray(ref1), atol=1e-4, rtol=1e-4)

    # --- test 2: even kernel, stride 3, explicit padding/output_padding, Hilbert pairs ---
    layer2 = FreqRespSampConvTranspose1d(
        in_channels=C_in, out_channels=C_out, n_samples=48,
        filter_params=dict(min_cutoff_hz=100.0, max_cutoff_hz=3000.0),
        use_Hilbert_transforms=True)
    layer2.prepare(sample_rate=8000, kernel_size=8, stride=3,
                   padding=2, output_padding=1)
    x2 = jax.random.normal(k2, (B, C_in, T), dtype=jnp.float32)
    out2 = jax.block_until_ready(layer2.forward(x2))
    ref2 = jax.block_until_ready(conv_transpose1d_ref(
        x2, layer2.weights(), layer2.stride, layer2.padding,
        layer2.output_padding))
    assert out2.shape == ref2.shape, (out2.shape, ref2.shape)
    assert np.allclose(np.asarray(out2), np.asarray(ref2), atol=1e-4, rtol=1e-4)

    # --- test 3: multiple time tiles (exercises halo handling at tile seams) ---
    x3 = jax.random.normal(k3, (1, C_in, 150), dtype=jnp.float32)
    out3 = jax.block_until_ready(conv_transpose1d_pallas(
        x3, layer.weights(), layer.stride, layer.padding, layer.output_padding,
        tm_max=128))
    ref3 = jax.block_until_ready(conv_transpose1d_ref(
        x3, layer.weights(), layer.stride, layer.padding, layer.output_padding))
    assert np.allclose(np.asarray(out3), np.asarray(ref3), atol=1e-4, rtol=1e-4)

    print("KERNEL_OK")
</pallas_src>

<mosaic_0001>
module attributes {stable_mosaic.version = 11 : i64} {
  func.func @_convt_poly_kernel(%arg0: i32, %arg1: i32, %arg2: memref<3x40xf32, #tpu.memory_space<vmem>>, %arg3: memref<1x1x4x133xf32, #tpu.memory_space<vmem>>, %arg4: memref<1x2x3x128xf32, #tpu.memory_space<vmem>>) attributes {dimension_semantics = [#tpu.dimension_semantics<parallel>, #tpu.dimension_semantics<parallel>], iteration_bounds = array<i64: 2, 1>, scalar_prefetch = 0 : i64, scratch_operands = 0 : i64, tpu.core_type = #tpu.core_type<tc>, window_params = [{pipeline_mode = #tpu.pipeline_mode<synchronous>, transform_indices = @transform_0, window_bounds = array<i64: 3, 40>}, {transform_indices = @transform_1, window_bounds = array<i64: 1, 1, 4, 133>}, {transform_indices = @transform_2, window_bounds = array<i64: 1, 2, 3, 128>}]} {
    %cst = arith.constant 0.000000e+00 : f32
    %0 = vector.broadcast %cst : f32 to vector<3x128xf32>
    %c0 = arith.constant 0 : index
    %c0_0 = arith.constant 0 : index
    %c0_1 = arith.constant 0 : index
    %c4 = arith.constant 4 : index
    %1 = vector.load %arg3[%c0, %c0_0, %c0_1, %c4] : memref<1x1x4x133xf32, #tpu.memory_space<vmem>>, vector<1x1x4x128xf32>
    %2 = vector.shape_cast %1 : vector<1x1x4x128xf32> to vector<4x128xf32>
    %c0_2 = arith.constant 0 : index
    %c0_3 = arith.constant 0 : index
    %3 = vector.load %arg2[%c0_2, %c0_3] : memref<3x40xf32, #tpu.memory_space<vmem>>, vector<3x1xf32>
    %4 = vector.extract_strided_slice %2 {offsets = [0, 0], sizes = [1, 128], strides = [1, 1]} : vector<4x128xf32> to vector<1x128xf32>
    %5 = vector.broadcast %3 : vector<3x1xf32> to vector<3x128xf32>
    %6 = vector.broadcast %4 : vector<1x128xf32> to vector<3x128xf32>
    %7 = arith.mulf %5, %6 : vector<3x128xf32>
    %8 = arith.addf %0, %7 : vector<3x128xf32>
    %c0_4 = arith.constant 0 : index
    %c1 = arith.constant 1 : index
    %9 = vector.load %arg2[%c0_4, %c1] : memref<3x40xf32, #tpu.memory_space<vmem>>, vector<3x1xf32>
    %10 = vector.extract_strided_slice %2 {offsets = [1, 0], sizes = [1, 128], strides = [1, 1]} : vector<4x128xf32> to vector<1x128xf32>
    %11 = vector.broadcast %9 : vector<3x1xf32> to vector<3x128xf32>
    %12 = vector.broadcast %10 : vector<1x128xf32> to vector<3x128xf32>
    %13 = arith.mulf %11, %12 : vector<3x128xf32>
    %14 = arith.addf %8, %13 : vector<3x128xf32>
    %c0_5 = arith.constant 0 : index
    %c2 = arith.constant 2 : index
    %15 = vector.load %arg2[%c0_5, %c2] : memref<3x40xf32, #tpu.memory_space<vmem>>, vector<3x1xf32>
    %16 = vector.extract_strided_slice %2 {offsets = [2, 0], sizes = [1, 128], strides = [1, 1]} : vector<4x128xf32> to vector<1x128xf32>
    %17 = vector.broadcast %15 : vector<3x1xf32> to vector<3x128xf32>
    %18 = vector.broadcast %16 : vector<1x128xf32> to vector<3x128xf32>
    %19 = arith.mulf %17, %18 : vector<3x128xf32>
    %20 = arith.addf %14, %19 : vector<3x128xf32>
    %c0_6 = arith.constant 0 : index
    %c3 = arith.constant 3 : index
    %21 = vector.load %arg2[%c0_6, %c3] : memref<3x40xf32, #tpu.memory_space<vmem>>, vector<3x1xf32>
    %22 = vector.extract_strided_slice %2 {offsets = [3, 0], sizes = [1, 128], strides = [1, 1]} : vector<4x128xf32> to vector<1x128xf32>
    %23 = vector.broadcast %21 : vector<3x1xf32> to vector<3x128xf32>
    %24 = vector.broadcast %22 : vector<1x128xf32> to vector<3x128xf32>
    %25 = arith.mulf %23, %24 : vector<3x128xf32>
    %26 = arith.addf %20, %25 : vector<3x128xf32>
    %c0_7 = arith.constant 0 : index
    %c0_8 = arith.constant 0 : index
    %c0_9 = arith.constant 0 : index
    %c3_10 = arith.constant 3 : index
    %27 = vector.load %arg3[%c0_7, %c0_8, %c0_9, %c3_10] : memref<1x1x4x133xf32, #tpu.memory_space<vmem>>, vector<1x1x4x128xf32>
    %28 = vector.shape_cast %27 : vector<1x1x4x128xf32> to vector<4x128xf32>
    %c0_11 = arith.constant 0 : index
    %c4_12 = arith.constant 4 : index
    %29 = vector.load %arg2[%c0_11, %c4_12] : memref<3x40xf32, #tpu.memory_space<vmem>>, vector<3x1xf32>
    %30 = vector.extract_strided_slice %28 {offsets = [0, 0], sizes = [1, 128], strides = [1, 1]} : vector<4x128xf32> to vector<1x128xf32>
    %31 = vector.broadcast %29 : vector<3x1xf32> to vector<3x128xf32>
    %32 = vector.broadcast %30 : vector<1x128xf32> to vector<3x128xf32>
    %33 = arith.mulf %31, %32 : vector<3x128xf32>
    %34 = arith.addf %26, %33 : vector<3x128xf32>
    %c0_13 = arith.constant 0 : index
    %c5 = arith.constant 5 : index
    %35 = vector.load %arg2[%c0_13, %c5] : memref<3x40xf32, #tpu.memory_space<vmem>>, vector<3x1xf32>
    %36 = vector.extract_strided_slice %28 {offsets = [1, 0], sizes = [1, 128], strides = [1, 1]} : vector<4x128xf32> to vector<1x128xf32>
    %37 = vector.broadcast %35 : vector<3x1xf32> to vector<3x128xf32>
    %38 = vector.broadcast %36 : vector<1x128xf32> to vector<3x128xf32>
    %39 = arith.mulf %37, %38 : vector<3x128xf32>
    %40 = arith.addf %34, %39 : vector<3x128xf32>
    %c0_14 = arith.constant 0 : index
    %c6 = arith.constant 6 : index
    %41 = vector.load %arg2[%c0_14, %c6] : memref<3x40xf32, #tpu.memory_space<vmem>>, vector<3x1xf32>
    %42 = vector.extract_strided_slice %28 {offsets = [2, 0], sizes = [1, 128], strides = [1, 1]} : vector<4x128xf32> to vector<1x128xf32>
    %43 = vector.broadcast %41 : vector<3x1xf32> to vector<3x128xf32>
    %44 = vector.broadcast %42 : vector<1x128xf32> to vector<3x128xf32>
    %45 = arith.mulf %43, %44 : vector<3x128xf32>
    %46 = arith.addf %40, %45 : vector<3x128xf32>
    %c0_15 = arith.constant 0 : index
    %c7 = arith.constant 7 : index
    %47 = vector.load %arg2[%c0_15, %c7] : memref<3x40xf32, #tpu.memory_space<vmem>>, vector<3x1xf32>
    %48 = vector.extract_strided_slice %28 {offsets = [3, 0], sizes = [1, 128], strides = [1, 1]} : vector<4x128xf32> to vector<1x128xf32>
    %49 = vector.broadcast %47 : vector<3x1xf32> to vector<3x128xf32>
    %50 = vector.broadcast %48 : vector<1x128xf32> to vector<3x128xf32>
    %51 = arith.mulf %49, %50 : vector<3x128xf32>
    %52 = arith.addf %46, %51 : vector<3x128xf32>
    %c0_16 = arith.constant 0 : index
    %c0_17 = arith.constant 0 : index
    %c0_18 = arith.constant 0 : index
    %c2_19 = arith.constant 2 : index
    %53 = vector.load %arg3[%c0_16, %c0_17, %c0_18, %c2_19] : memref<1x1x4x133xf32, #tpu.memory_space<vmem>>, vector<1x1x4x128xf32>
    %54 = vector.shape_cast %53 : vector<1x1x4x128xf32> to vector<4x128xf32>
    %c0_20 = arith.constant 0 : index
    %c8 = arith.constant 8 : index
    %55 = vector.load %arg2[%c0_20, %c8] : memref<3x40xf32, #tpu.memory_space<vmem>>, vector<3x1xf32>
    %56 = vector.extract_strided_slice %54 {offsets = [0, 0], sizes = [1, 128], strides = [1, 1]} : vector<4x128xf32> to vector<1x128xf32>
    %57 = vector.broadcast %55 : vector<3x1xf32> to vector<3x128xf32>
    %58 = vector.broadcast %56 : vector<1x128xf32> to vector<3x128xf32>
    %59 = arith.mulf %57, %58 : vector<3x128xf32>
    %60 = arith.addf %52, %59 : vector<3x128xf32>
    %c0_21 = arith.constant 0 : index
    %c9 = arith.constant 9 : index
    %61 = vector.load %arg2[%c0_21, %c9] : memref<3x40xf32, #tpu.memory_space<vmem>>, vector<3x1xf32>
    %62 = vector.extract_strided_slice %54 {offsets = [1, 0], sizes = [1, 128], strides = [1, 1]} : vector<4x128xf32> to vector<1x128xf32>
    %63 = vector.broadcast %61 : vector<3x1xf32> to vector<3x128xf32>
    %64 = vector.broadcast %62 : vector<1x128xf32> to vector<3x128xf32>
    %65 = arith.mulf %63, %64 : vector<3x128xf32>
    %66 = arith.addf %60, %65 : vector<3x128xf32>
    %c0_22 = arith.constant 0 : index
    %c10 = arith.constant 10 : index
    %67 = vector.load %arg2[%c0_22, %c10] : memref<3x40xf32, #tpu.memory_space<vmem>>, vector<3x1xf32>
    %68 = vector.extract_strided_slice %54 {offsets = [2, 0], sizes = [1, 128], strides = [1, 1]} : vector<4x128xf32> to vector<1x128xf32>
    %69 = vector.broadcast %67 : vector<3x1xf32> to vector<3x128xf32>
    %70 = vector.broadcast %68 : vector<1x128xf32> to vector<3x128xf32>
    %71 = arith.mulf %69, %70 : vector<3x128xf32>
    %72 = arith.addf %66, %71 : vector<3x128xf32>
    %c0_23 = arith.constant 0 : index
    %c11 = arith.constant 11 : index
    %73 = vector.load %arg2[%c0_23, %c11] : memref<3x40xf32, #tpu.memory_space<vmem>>, vector<3x1xf32>
    %74 = vector.extract_strided_slice %54 {offsets = [3, 0], sizes = [1, 128], strides = [1, 1]} : vector<4x128xf32> to vector<1x128xf32>
    %75 = vector.broadcast %73 : vector<3x1xf32> to vector<3x128xf32>
    %76 = vector.broadcast %74 : vector<1x128xf32> to vector<3x128xf32>
    %77 = arith.mulf %75, %76 : vector<3x128xf32>
    %78 = arith.addf %72, %77 : vector<3x128xf32>
    %c0_24 = arith.constant 0 : index
    %c0_25 = arith.constant 0 : index
    %c0_26 = arith.constant 0 : index
    %c1_27 = arith.constant 1 : index
    %79 = vector.load %arg3[%c0_24, %c0_25, %c0_26, %c1_27] : memref<1x1x4x133xf32, #tpu.memory_space<vmem>>, vector<1x1x4x128xf32>
    %80 = vector.shape_cast %79 : vector<1x1x4x128xf32> to vector<4x128xf32>
    %c0_28 = arith.constant 0 : index
    %c12 = arith.constant 12 : index
    %81 = vector.load %arg2[%c0_28, %c12] : memref<3x40xf32, #tpu.memory_space<vmem>>, vector<3x1xf32>
    %82 = vector.extract_strided_slice %80 {offsets = [0, 0], sizes = [1, 128], strides = [1, 1]} : vector<4x128xf32> to vector<1x128xf32>
    %83 = vector.broadcast %81 : vector<3x1xf32> to vector<3x128xf32>
    %84 = vector.broadcast %82 : vector<1x128xf32> to vector<3x128xf32>
    %85 = arith.mulf %83, %84 : vector<3x128xf32>
    %86 = arith.addf %78, %85 : vector<3x128xf32>
    %c0_29 = arith.constant 0 : index
    %c13 = arith.constant 13 : index
    %87 = vector.load %arg2[%c0_29, %c13] : memref<3x40xf32, #tpu.memory_space<vmem>>, vector<3x1xf32>
    %88 = vector.extract_strided_slice %80 {offsets = [1, 0], sizes = [1, 128], strides = [1, 1]} : vector<4x128xf32> to vector<1x128xf32>
    %89 = vector.broadcast %87 : vector<3x1xf32> to vector<3x128xf32>
    %90 = vector.broadcast %88 : vector<1x128xf32> to vector<3x128xf32>
    %91 = arith.mulf %89, %90 : vector<3x128xf32>
    %92 = arith.addf %86, %91 : vector<3x128xf32>
    %c0_30 = arith.constant 0 : index
    %c14 = arith.constant 14 : index
    %93 = vector.load %arg2[%c0_30, %c14] : memref<3x40xf32, #tpu.memory_space<vmem>>, vector<3x1xf32>
    %94 = vector.extract_strided_slice %80 {offsets = [2, 0], sizes = [1, 128], strides = [1, 1]} : vector<4x128xf32> to vector<1x128xf32>
    %95 = vector.broadcast %93 : vector<3x1xf32> to vector<3x128xf32>
    %96 = vector.broadcast %94 : vector<1x128xf32> to vector<3x128xf32>
    %97 = arith.mulf %95, %96 : vector<3x128xf32>
    %98 = arith.addf %92, %97 : vector<3x128xf32>
    %c0_31 = arith.constant 0 : index
    %c15 = arith.constant 15 : index
    %99 = vector.load %arg2[%c0_31, %c15] : memref<3x40xf32, #tpu.memory_space<vmem>>, vector<3x1xf32>
    %100 = vector.extract_strided_slice %80 {offsets = [3, 0], sizes = [1, 128], strides = [1, 1]} : vector<4x128xf32> to vector<1x128xf32>
    %101 = vector.broadcast %99 : vector<3x1xf32> to vector<3x128xf32>
    %102 = vector.broadcast %100 : vector<1x128xf32> to vector<3x128xf32>
    %103 = arith.mulf %101, %102 : vector<3x128xf32>
    %104 = arith.addf %98, %103 : vector<3x128xf32>
    %c0_32 = arith.constant 0 : index
    %c0_33 = arith.constant 0 : index
    %c0_34 = arith.constant 0 : index
    %c0_35 = arith.constant 0 : index
    %105 = vector.load %arg4[%c0_32, %c0_33, %c0_34, %c0_35] : memref<1x2x3x128xf32, #tpu.memory_space<vmem>>, vector<1x1x3x128xf32>
    %106 = vector.shape_cast %105 : vector<1x1x3x128xf32> to vector<3x128xf32>
    %107 = vector.shape_cast %104 : vector<3x128xf32> to vector<1x1x3x128xf32>
    tpu.vector_store %arg4[%c0_32, %c0_33, %c0_34, %c0_35], %107 {strides = array<i32>} : memref<1x2x3x128xf32, #tpu.memory_space<vmem>>, vector<1x1x3x128xf32>,
    %cst_36 = arith.constant 0.000000e+00 : f32
    %108 = vector.broadcast %cst_36 : f32 to vector<3x128xf32>
    %c0_37 = arith.constant 0 : index
    %c0_38 = arith.constant 0 : index
    %c0_39 = arith.constant 0 : index
    %c5_40 = arith.constant 5 : index
    %109 = vector.load %arg3[%c0_37, %c0_38, %c0_39, %c5_40] : memref<1x1x4x133xf32, #tpu.memory_space<vmem>>, vector<1x1x4x128xf32>
    %110 = vector.shape_cast %109 : vector<1x1x4x128xf32> to vector<4x128xf32>
    %c0_41 = arith.constant 0 : index
    %c20 = arith.constant 20 : index
    %111 = vector.load %arg2[%c0_41, %c20] : memref<3x40xf32, #tpu.memory_space<vmem>>, vector<3x1xf32>
    %112 = vector.extract_strided_slice %110 {offsets = [0, 0], sizes = [1, 128], strides = [1, 1]} : vector<4x128xf32> to vector<1x128xf32>
    %113 = vector.broadcast %111 : vector<3x1xf32> to vector<3x128xf32>
    %114 = vector.broadcast %112 : vector<1x128xf32> to vector<3x128xf32>
    %115 = arith.mulf %113, %114 : vector<3x128xf32>
    %116 = arith.addf %108, %115 : vector<3x128xf32>
    %c0_42 = arith.constant 0 : index
    %c21 = arith.constant 21 : index
    %117 = vector.load %arg2[%c0_42, %c21] : memref<3x40xf32, #tpu.memory_space<vmem>>, vector<3x1xf32>
    %118 = vector.extract_strided_slice %110 {offsets = [1, 0], sizes = [1, 128], strides = [1, 1]} : vector<4x128xf32> to vector<1x128xf32>
    %119 = vector.broadcast %117 : vector<3x1xf32> to vector<3x128xf32>
    %120 = vector.broadcast %118 : vector<1x128xf32> to vector<3x128xf32>
    %121 = arith.mulf %119, %120 : vector<3x128xf32>
    %122 = arith.addf %116, %121 : vector<3x128xf32>
    %c0_43 = arith.constant 0 : index
    %c22 = arith.constant 22 : index
    %123 = vector.load %arg2[%c0_43, %c22] : memref<3x40xf32, #tpu.memory_space<vmem>>, vector<3x1xf32>
    %124 = vector.extract_strided_slice %110 {offsets = [2, 0], sizes = [1, 128], strides = [1, 1]} : vector<4x128xf32> to vector<1x128xf32>
    %125 = vector.broadcast %123 : vector<3x1xf32> to vector<3x128xf32>
    %126 = vector.broadcast %124 : vector<1x128xf32> to vector<3x128xf32>
    %127 = arith.mulf %125, %126 : vector<3x128xf32>
    %128 = arith.addf %122, %127 : vector<3x128xf32>
    %c0_44 = arith.constant 0 : index
    %c23 = arith.constant 23 : index
    %129 = vector.load %arg2[%c0_44, %c23] : memref<3x40xf32, #tpu.memory_space<vmem>>, vector<3x1xf32>
    %130 = vector.extract_strided_slice %110 {offsets = [3, 0], sizes = [1, 128], strides = [1, 1]} : vector<4x128xf32> to vector<1x128xf32>
    %131 = vector.broadcast %129 : vector<3x1xf32> to vector<3x128xf32>
    %132 = vector.broadcast %130 : vector<1x128xf32> to vector<3x128xf32>
    %133 = arith.mulf %131, %132 : vector<3x128xf32>
    %134 = arith.addf %128, %133 : vector<3x128xf32>
    %c0_45 = arith.constant 0 : index
    %c0_46 = arith.constant 0 : index
    %c0_47 = arith.constant 0 : index
    %c4_48 = arith.constant 4 : index
    %135 = vector.load %arg3[%c0_45, %c0_46, %c0_47, %c4_48] : memref<1x1x4x133xf32, #tpu.memory_space<vmem>>, vector<1x1x4x128xf32>
    %136 = vector.shape_cast %135 : vector<1x1x4x128xf32> to vector<4x128xf32>
    %c0_49 = arith.constant 0 : index
    %c24 = arith.constant 24 : index
    %137 = vector.load %arg2[%c0_49, %c24] : memref<3x40xf32, #tpu.memory_space<vmem>>, vector<3x1xf32>
    %138 = vector.extract_strided_slice %136 {offsets = [0, 0], sizes = [1, 128], strides = [1, 1]} : vector<4x128xf32> to vector<1x128xf32>
    %139 = vector.broadcast %137 : vector<3x1xf32> to vector<3x128xf32>
    %140 = vector.broadcast %138 : vector<1x128xf32> to vector<3x128xf32>
    %141 = arith.mulf %139, %140 : vector<3x128xf32>
    %142 = arith.addf %134, %141 : vector<3x128xf32>
    %c0_50 = arith.constant 0 : index
    %c25 = arith.constant 25 : index
    %143 = vector.load %arg2[%c0_50, %c25] : memref<3x40xf32, #tpu.memory_space<vmem>>, vector<3x1xf32>
    %144 = vector.extract_strided_slice %136 {offsets = [1, 0], sizes = [1, 128], strides = [1, 1]} : vector<4x128xf32> to vector<1x128xf32>
    %145 = vector.broadcast %143 : vector<3x1xf32> to vector<3x128xf32>
    %146 = vector.broadcast %144 : vector<1x128xf32> to vector<3x128xf32>
    %147 = arith.mulf %145, %146 : vector<3x128xf32>
    %148 = arith.addf %142, %147 : vector<3x128xf32>
    %c0_51 = arith.constant 0 : index
    %c26 = arith.constant 26 : index
    %149 = vector.load %arg2[%c0_51, %c26] : memref<3x40xf32, #tpu.memory_space<vmem>>, vector<3x1xf32>
    %150 = vector.extract_strided_slice %136 {offsets = [2, 0], sizes = [1, 128], strides = [1, 1]} : vector<4x128xf32> to vector<1x128xf32>
    %151 = vector.broadcast %149 : vector<3x1xf32> to vector<3x128xf32>
    %152 = vector.broadcast %150 : vector<1x128xf32> to vector<3x128xf32>
    %153 = arith.mulf %151, %152 : vector<3x128xf32>
    %154 = arith.addf %148, %153 : vector<3x128xf32>
    %c0_52 = arith.constant 0 : index
    %c27 = arith.constant 27 : index
    %155 = vector.load %arg2[%c0_52, %c27] : memref<3x40xf32, #tpu.memory_space<vmem>>, vector<3x1xf32>
    %156 = vector.extract_strided_slice %136 {offsets = [3, 0], sizes = [1, 128], strides = [1, 1]} : vector<4x128xf32> to vector<1x128xf32>
    %157 = vector.broadcast %155 : vector<3x1xf32> to vector<3x128xf32>
    %158 = vector.broadcast %156 : vector<1x128xf32> to vector<3x128xf32>
    %159 = arith.mulf %157, %158 : vector<3x128xf32>
    %160 = arith.addf %154, %159 : vector<3x128xf32>
    %c0_53 = arith.constant 0 : index
    %c0_54 = arith.constant 0 : index
    %c0_55 = arith.constant 0 : index
    %c3_56 = arith.constant 3 : index
    %161 = vector.load %arg3[%c0_53, %c0_54, %c0_55, %c3_56] : memref<1x1x4x133xf32, #tpu.memory_space<vmem>>, vector<1x1x4x128xf32>
    %162 = vector.shape_cast %161 : vector<1x1x4x128xf32> to vector<4x128xf32>
    %c0_57 = arith.constant 0 : index
    %c28 = arith.constant 28 : index
    %163 = vector.load %arg2[%c0_57, %c28] : memref<3x40xf32, #tpu.memory_space<vmem>>, vector<3x1xf32>
    %164 = vector.extract_strided_slice %162 {offsets = [0, 0], sizes = [1, 128], strides = [1, 1]} : vector<4x128xf32> to vector<1x128xf32>
    %165 = vector.broadcast %163 : vector<3x1xf32> to vector<3x128xf32>
    %166 = vector.broadcast %164 : vector<1x128xf32> to vector<3x128xf32>
    %167 = arith.mulf %165, %166 : vector<3x128xf32>
    %168 = arith.addf %160, %167 : vector<3x128xf32>
    %c0_58 = arith.constant 0 : index
    %c29 = arith.constant 29 : index
    %169 = vector.load %arg2[%c0_58, %c29] : memref<3x40xf32, #tpu.memory_space<vmem>>, vector<3x1xf32>
    %170 = vector.extract_strided_slice %162 {offsets = [1, 0], sizes = [1, 128], strides = [1, 1]} : vector<4x128xf32> to vector<1x128xf32>
    %171 = vector.broadcast %169 : vector<3x1xf32> to vector<3x128xf32>
    %172 = vector.broadcast %170 : vector<1x128xf32> to vector<3x128xf32>
    %173 = arith.mulf %171, %172 : vector<3x128xf32>
    %174 = arith.addf %168, %173 : vector<3x128xf32>
    %c0_59 = arith.constant 0 : index
    %c30 = arith.constant 30 : index
    %175 = vector.load %arg2[%c0_59, %c30] : memref<3x40xf32, #tpu.memory_space<vmem>>, vector<3x1xf32>
    %176 = vector.extract_strided_slice %162 {offsets = [2, 0], sizes = [1, 128], strides = [1, 1]} : vector<4x128xf32> to vector<1x128xf32>
    %177 = vector.broadcast %175 : vector<3x1xf32> to vector<3x128xf32>
    %178 = vector.broadcast %176 : vector<1x128xf32> to vector<3x128xf32>
    %179 = arith.mulf %177, %178 : vector<3x128xf32>
    %180 = arith.addf %174, %179 : vector<3x128xf32>
    %c0_60 = arith.constant 0 : index
    %c31 = arith.constant 31 : index
    %181 = vector.load %arg2[%c0_60, %c31] : memref<3x40xf32, #tpu.memory_space<vmem>>, vector<3x1xf32>
    %182 = vector.extract_strided_slice %162 {offsets = [3, 0], sizes = [1, 128], strides = [1, 1]} : vector<4x128xf32> to vector<1x128xf32>
    %183 = vector.broadcast %181 : vector<3x1xf32> to vector<3x128xf32>
    %184 = vector.broadcast %182 : vector<1x128xf32> to vector<3x128xf32>
    %185 = arith.mulf %183, %184 : vector<3x128xf32>
    %186 = arith.addf %180, %185 : vector<3x128xf32>
    %c0_61 = arith.constant 0 : index
    %c0_62 = arith.constant 0 : index
    %c0_63 = arith.constant 0 : index
    %c2_64 = arith.constant 2 : index
    %187 = vector.load %arg3[%c0_61, %c0_62, %c0_63, %c2_64] : memref<1x1x4x133xf32, #tpu.memory_space<vmem>>, vector<1x1x4x128xf32>
    %188 = vector.shape_cast %187 : vector<1x1x4x128xf32> to vector<4x128xf32>
    %c0_65 = arith.constant 0 : index
    %c32 = arith.constant 32 : index
    %189 = vector.load %arg2[%c0_65, %c32] : memref<3x40xf32, #tpu.memory_space<vmem>>, vector<3x1xf32>
    %190 = vector.extract_strided_slice %188 {offsets = [0, 0], sizes = [1, 128], strides = [1, 1]} : vector<4x128xf32> to vector<1x128xf32>
    %191 = vector.broadcast %189 : vector<3x1xf32> to vector<3x128xf32>
    %192 = vector.broadcast %190 : vector<1x128xf32> to vector<3x128xf32>
    %193 = arith.mulf %191, %192 : vector<3x128xf32>
    %194 = arith.addf %186, %193 : vector<3x128xf32>
    %c0_66 = arith.constant 0 : index
    %c33 = arith.constant 33 : index
    %195 = vector.load %arg2[%c0_66, %c33] : memref<3x40xf32, #tpu.memory_space<vmem>>, vector<3x1xf32>
    %196 = vector.extract_strided_slice %188 {offsets = [1, 0], sizes = [1, 128], strides = [1, 1]} : vector<4x128xf32> to vector<1x128xf32>
    %197 = vector.broadcast %195 : vector<3x1xf32> to vector<3x128xf32>
    %198 = vector.broadcast %196 : vector<1x128xf32> to vector<3x128xf32>
    %199 = arith.mulf %197, %198 : vector<3x128xf32>
    %200 = arith.addf %194, %199 : vector<3x128xf32>
    %c0_67 = arith.constant 0 : index
    %c34 = arith.constant 34 : index
    %201 = vector.load %arg2[%c0_67, %c34] : memref<3x40xf32, #tpu.memory_space<vmem>>, vector<3x1xf32>
    %202 = vector.extract_strided_slice %188 {offsets = [2, 0], sizes = [1, 128], strides = [1, 1]} : vector<4x128xf32> to vector<1x128xf32>
    %203 = vector.broadcast %201 : vector<3x1xf32> to vector<3x128xf32>
    %204 = vector.broadcast %202 : vector<1x128xf32> to vector<3x128xf32>
    %205 = arith.mulf %203, %204 : vector<3x128xf32>
    %206 = arith.addf %200, %205 : vector<3x128xf32>
    %c0_68 = arith.constant 0 : index
    %c35 = arith.constant 35 : index
    %207 = vector.load %arg2[%c0_68, %c35] : memref<3x40xf32, #tpu.memory_space<vmem>>, vector<3x1xf32>
    %208 = vector.extract_strided_slice %188 {offsets = [3, 0], sizes = [1, 128], strides = [1, 1]} : vector<4x128xf32> to vector<1x128xf32>
    %209 = vector.broadcast %207 : vector<3x1xf32> to vector<3x128xf32>
    %210 = vector.broadcast %208 : vector<1x128xf32> to vector<3x128xf32>
    %211 = arith.mulf %209, %210 : vector<3x128xf32>
    %212 = arith.addf %206, %211 : vector<3x128xf32>
    %c0_69 = arith.constant 0 : index
    %c0_70 = arith.constant 0 : index
    %c0_71 = arith.constant 0 : index
    %c1_72 = arith.constant 1 : index
    %213 = vector.load %arg3[%c0_69, %c0_70, %c0_71, %c1_72] : memref<1x1x4x133xf32, #tpu.memory_space<vmem>>, vector<1x1x4x128xf32>
    %214 = vector.shape_cast %213 : vector<1x1x4x128xf32> to vector<4x128xf32>
    %c0_73 = arith.constant 0 : index
    %c36 = arith.constant 36 : index
    %215 = vector.load %arg2[%c0_73, %c36] : memref<3x40xf32, #tpu.memory_space<vmem>>, vector<3x1xf32>
    %216 = vector.extract_strided_slice %214 {offsets = [0, 0], sizes = [1, 128], strides = [1, 1]} : vector<4x128xf32> to vector<1x128xf32>
    %217 = vector.broadcast %215 : vector<3x1xf32> to vector<3x128xf32>
    %218 = vector.broadcast %216 : vector<1x128xf32> to vector<3x128xf32>
    %219 = arith.mulf %217, %218 : vector<3x128xf32>
    %220 = arith.addf %212, %219 : vector<3x128xf32>
    %c0_74 = arith.constant 0 : index
    %c37 = arith.constant 37 : index
    %221 = vector.load %arg2[%c0_74, %c37] : memref<3x40xf32, #tpu.memory_space<vmem>>, vector<3x1xf32>
    %222 = vector.extract_strided_slice %214 {offsets = [1, 0], sizes = [1, 128], strides = [1, 1]} : vector<4x128xf32> to vector<1x128xf32>
    %223 = vector.broadcast %221 : vector<3x1xf32> to vector<3x128xf32>
    %224 = vector.broadcast %222 : vector<1x128xf32> to vector<3x128xf32>
    %225 = arith.mulf %223, %224 : vector<3x128xf32>
    %226 = arith.addf %220, %225 : vector<3x128xf32>
    %c0_75 = arith.constant 0 : index
    %c38 = arith.constant 38 : index
    %227 = vector.load %arg2[%c0_75, %c38] : memref<3x40xf32, #tpu.memory_space<vmem>>, vector<3x1xf32>
    %228 = vector.extract_strided_slice %214 {offsets = [2, 0], sizes = [1, 128], strides = [1, 1]} : vector<4x128xf32> to vector<1x128xf32>
    %229 = vector.broadcast %227 : vector<3x1xf32> to vector<3x128xf32>
    %230 = vector.broadcast %228 : vector<1x128xf32> to vector<3x128xf32>
    %231 = arith.mulf %229, %230 : vector<3x128xf32>
    %232 = arith.addf %226, %231 : vector<3x128xf32>
    %c0_76 = arith.constant 0 : index
    %c39 = arith.constant 39 : index
    %233 = vector.load %arg2[%c0_76, %c39] : memref<3x40xf32, #tpu.memory_space<vmem>>, vector<3x1xf32>
    %234 = vector.extract_strided_slice %214 {offsets = [3, 0], sizes = [1, 128], strides = [1, 1]} : vector<4x128xf32> to vector<1x128xf32>
    %235 = vector.broadcast %233 : vector<3x1xf32> to vector<3x128xf32>
    %236 = vector.broadcast %234 : vector<1x128xf32> to vector<3x128xf32>
    %237 = arith.mulf %235, %236 : vector<3x128xf32>
    %238 = arith.addf %232, %237 : vector<3x128xf32>
    %c0_77 = arith.constant 0 : index
    %c1_78 = arith.constant 1 : index
    %c0_79 = arith.constant 0 : index
    %c0_80 = arith.constant 0 : index
    %239 = vector.load %arg4[%c0_77, %c1_78, %c0_79, %c0_80] : memref<1x2x3x128xf32, #tpu.memory_space<vmem>>, vector<1x1x3x128xf32>
    %240 = vector.shape_cast %239 : vector<1x1x3x128xf32> to vector<3x128xf32>
    %241 = vector.shape_cast %238 : vector<3x128xf32> to vector<1x1x3x128xf32>
    tpu.vector_store %arg4[%c0_77, %c1_78, %c0_79, %c0_80], %241 {strides = array<i32>} : memref<1x2x3x128xf32, #tpu.memory_space<vmem>>, vector<1x1x3x128xf32>,
    return
  }
  func.func @transform_0(%arg0: i32, %arg1: i32) -> (i32, i32) {
    %c0_i32 = arith.constant 0 : i32
    %c0_i32_0 = arith.constant 0 : i32
    %c0_i32_1 = arith.constant 0 : i32
    return %c0_i32, %c0_i32_0 : i32, i32
  }
  func.func @transform_1(%arg0: i32, %arg1: i32) -> (i32, i32, i32, i32) {
    %c0_i32 = arith.constant 0 : i32
    %c0_i32_0 = arith.constant 0 : i32
    %c0_i32_1 = arith.constant 0 : i32
    return %arg0, %arg1, %c0_i32, %c0_i32_0 : i32, i32, i32, i32
  }
  func.func @transform_2(%arg0: i32, %arg1: i32) -> (i32, i32, i32, i32) {
    %c0_i32 = arith.constant 0 : i32
    %c0_i32_0 = arith.constant 0 : i32
    %c0_i32_1 = arith.constant 0 : i32
    return %arg0, %c0_i32, %c0_i32_0, %arg1 : i32, i32, i32, i32
  }
}

</mosaic_0001>

<llo_original>
// kernel: tpu_custom_call.1
$region0: #{tpu_custom_call.1}
  #allocation0 [shape = 'u32[]', space=smem, size = 0x4, offset = 0x4, fixed_abs, tag = 'smem constant byte address 0x4 - core index']
  #allocation1 [shape = 'u32[144,128]{1,0:T(1,128)}', space=vmem, size = 0x12000, scoped, tag = 'internal scratch']
  %s0 = inlined_call_operand.hbm [shape: f32[3,40], index: 0, kind: input, shape index: {}]
  %s1 = inlined_call_operand.hbm [shape: f32[2,1,4,133], index: 1, kind: input, shape index: {}]
  %s2 = inlined_call_operand.vmem [shape: f32[2,2,3,128], index: 2, kind: output, shape index: {}]
  %s3 = sld [smem:[#allocation0]]
  $region49: #{tpu_custom_call.1} parent=0
    _
  %s5 = ssub.s32 1, %s3
  %s6 = scalar_select 0, %s5, %s3
  $region1: #{tpu_custom_call.1} parent=0
    #allocation2 [shape = 'u8[2048]{0}', space=vmem, size = 0x800, scoped, tag = 'input window, operand 0, single buffered']
    #allocation3 [shape = 's32[2]{0}', space=sflag, size = 0x8, scoped, tag = 'scoped memory for tpu_custom_call.1']
    #allocation4 [shape = 'u8[8192]{0}', space=vmem, size = 0x2000, scoped, tag = 'input window, operand 1']
    #allocation5 [shape = 's32[2]{0}', space=sflag, size = 0x8, scoped, tag = 'scoped memory for tpu_custom_call.1']
    %7 = vsyncpa [#allocation3], 0
    %8 = vsyncpa [#allocation5], 0
    %s9 = scalar_lea.sflag [#allocation5], 1
    %10 = vsyncpa %s9, 0
    loop: start=0, step=1, limit=4
    $region2: #{tpu_custom_call.1} parent=1 // loop_pre_header
      _
    $region3: #{tpu_custom_call.1} parent=1 // loop_header
      %s12 = sphi 0, %s16
      %p13 = scmp.ge.s32.totalorder %s12, 4
      %s19 = sphi 0, %s31
      %s20 = sphi 0, %s27
      %s21 = sphi 0, %s19
      %s22 = sphi 0, %s20
      %s23 = sphi 0, %s21
      %s24 = sphi 0, %s22
      %s32 = sphi 0, %s32
      %s34 = sphi 0, %s32
      %s35 = sphi 0, %s34
      %s49 = sphi 0, %s35
      %s57 = sphi 0, %s59
      %s60 = sphi 0, %s57
      %s61 = sphi 0, %s60
      %s77 = sphi 0, %s61
      %s85 = sphi 0, %s87
      %s88 = sphi 0, %s85
      %s89 = sphi 0, %s88
      %s105 = sphi 0, %s89
    $region4: #{tpu_custom_call.1} parent=1 // loop_header_branch
      %15 = sbr.rel (%p13) target = $region8
    $region5: #{tpu_custom_call.1} parent=1 // loop_body
      %s17 = ssub.s32 %s12, 1
      %s18 = ssub.s32 %s12, 2
      %s25 = sadd.s32 1, %s20
      %p26 = scmp.ge.s32.totalorder %s25, 1
      %s27 = scalar_select %p26, 0, %s25
      %s28 = sadd.s32 1, %s19
      %s29 = scalar_select %p26, %s28, %s19
      %p30 = scmp.ge.s32.totalorder %s29, 2
      %s31 = scalar_select %p30, 0, %s29
      %s33 = sadd.s32 %s32, 1
      %p36 = scmp.eq.s32.totalorder %s12, 1
      %p37 = scmp.ne.s32.totalorder %s32, %s34
      %p38 = scmp.eq.s32.totalorder %s12, 0
      %p39 = por %p37, %p38
      %p40 = scmp.ne.s32.totalorder %s32, %s34
      %p41 = scmp.eq.s32.totalorder %s17, 1
      %p42 = por %p40, %p41
      %p43 = scmp.ne.s32.totalorder %s34, %s35
      %p44 = scmp.eq.s32.totalorder %s17, 0
      %p45 = por %p43, %p44
      %p46 = scmp.ne.s32.totalorder %s34, %s35
      %p47 = scmp.eq.s32.totalorder %s18, 1
      %p48 = por %p46, %p47
      %p50 = scmp.ne.s32.totalorder %s35, %s49
      %p51 = scmp.eq.s32.totalorder %s18, 0
      %p52 = por %p50, %p51
      %s53 = ssub.s32 %s19, %s31
      %s54 = ssub.s32 %s20, %s27
      %s55 = sor.u32 %s53, %s54
      %p56 = scmp.eq.s32.totalorder %s55, 0
      %s58 = sadd.s32 %s57, 1
      %s59 = scalar_select %p56, %s57, %s58
      %p62 = pneg %p56
      %p63 = scmp.eq.s32.totalorder %s12, 1
      %p64 = por %p62, %p63
      %p65 = scmp.ne.s32.totalorder %s57, %s60
      %p66 = scmp.eq.s32.totalorder %s12, 0
      %p67 = por %p65, %p66
      %p68 = scmp.ne.s32.totalorder %s57, %s60
      %p69 = scmp.eq.s32.totalorder %s17, 1
      %p70 = por %p68, %p69
      %p71 = scmp.ne.s32.totalorder %s60, %s61
      %p72 = scmp.eq.s32.totalorder %s17, 0
      %p73 = por %p71, %p72
      %p74 = scmp.ne.s32.totalorder %s60, %s61
      %p75 = scmp.eq.s32.totalorder %s18, 1
      %p76 = por %p74, %p75
      %p78 = scmp.ne.s32.totalorder %s61, %s77
      %p79 = scmp.eq.s32.totalorder %s18, 0
      %p80 = por %p78, %p79
      %s81 = ssub.s32 %s19, %s31
      %s82 = ssub.s32 %s20, %s27
      %s83 = sor.u32 %s81, %s82
      %p84 = scmp.eq.s32.totalorder %s83, 0
      %s86 = sadd.s32 %s85, 1
      %s87 = scalar_select %p84, %s85, %s86
      %p90 = pneg %p84
      %p91 = scmp.eq.s32.totalorder %s12, 1
      %p92 = por %p90, %p91
      %p93 = scmp.ne.s32.totalorder %s85, %s88
      %p94 = scmp.eq.s32.totalorder %s12, 0
      %p95 = por %p93, %p94
      %p96 = scmp.ne.s32.totalorder %s85, %s88
      %p97 = scmp.eq.s32.totalorder %s17, 1
      %p98 = por %p96, %p97
      %p99 = scmp.ne.s32.totalorder %s88, %s89
      %p100 = scmp.eq.s32.totalorder %s17, 0
      %p101 = por %p99, %p100
      %p102 = scmp.ne.s32.totalorder %s88, %s89
      %p103 = scmp.eq.s32.totalorder %s18, 1
      %p104 = por %p102, %p103
      %p106 = scmp.ne.s32.totalorder %s89, %s105
      %p107 = scmp.eq.s32.totalorder %s18, 0
      %p108 = por %p106, %p107
      %p109 = scmp.le.s32.totalorder 1, %s12
      %p110 = scmp.lt.s32.totalorder %s12, 3
      %p111 = pnand %p109, %p110
      %p112 = pneg %p111
      // Predicated region
      $region9: #{tpu_custom_call.1} parent=5 // pred_check
        _
      $region10: #{tpu_custom_call.1} parent=5 // pred_check_branch
        %114 = sbr.rel (%p111) target = $region12
      $region11: #{tpu_custom_call.1} parent=5 // pred_region
        %s115 = ssub.s32 %s12, 1
        // Predicated region
        $region13: #{tpu_custom_call.1} parent=11 // pred_check
          %p116 = pneg %p45
        $region14: #{tpu_custom_call.1} parent=11 // pred_check_branch
          %118 = sbr.rel (%p116) target = $region16
        $region15: #{tpu_custom_call.1} parent=11 // pred_region
          %s120 = ssub.s32 64, 64
          %121 = vsyncadd [#allocation3], %s120
          %s123 = sshll.u32 [#allocation2], 4
          %s124 = int_to_ptr.vmem [resolvable:$true] %s123
          %126 = dma.hbm_to_vmem [thread:$0]  %s0, 64, %s124, [#allocation3]
        $region16: #{tpu_custom_call.1} parent=11 // pred_fallthru
          _
      $region12: #{tpu_custom_call.1} parent=5 // pred_fallthru
        _
      %p127 = scmp.lt.s32.totalorder %s12, 2
      // Predicated region
      $region17: #{tpu_custom_call.1} parent=5 // pred_check
        %p128 = pneg %p127
      $region18: #{tpu_custom_call.1} parent=5 // pred_check_branch
        %130 = sbr.rel (%p128) target = $region20
      $region19: #{tpu_custom_call.1} parent=5 // pred_region
        // Predicated region
        $region21: #{tpu_custom_call.1} parent=19 // pred_check
          %p131 = pneg %p67
        $region22: #{tpu_custom_call.1} parent=19 // pred_check_branch
          %133 = sbr.rel (%p131) target = $region24
        $region23: #{tpu_custom_call.1} parent=19 // pred_region
          %s134 = sand.u32 %s57, 1
          %s135 = scalar_lea.sflag [#allocation5], %s134
          %s136 = sand.u32 %s57, 1
          %s137 = smul.addr %s136, 8
          %s138 = scalar_lea.vmem [#allocation4], %s137
          %s140 = ssub.s32 128, 128
          %141 = vsyncadd %s135, %s140
          %s142 = smul.addr %s20, 2
          %s143 = smul.addr %s19, 2
          %s144 = sadd.s32 %s142, %s143
          %s145 = smul.addr %s144, 64
          %s146 = scalar_lea.hbm %s1, %s145
          %s148 = sshll.u32 %s138, 4
          %s149 = int_to_ptr.vmem [resolvable:$true] %s148
          %151 = dma.hbm_to_vmem [thread:$0]  %s146, 128, %s149, %s135
        $region24: #{tpu_custom_call.1} parent=19 // pred_fallthru
          _
      $region20: #{tpu_custom_call.1} parent=5 // pred_fallthru
        _
      %p152 = scmp.le.s32.totalorder 1, %s12
      %p153 = scmp.lt.s32.totalorder %s12, 3
      %p154 = pnand %p152, %p153
      %p155 = pneg %p154
      // Predicated region
      $region25: #{tpu_custom_call.1} parent=5 // pred_check
        _
      $region26: #{tpu_custom_call.1} parent=5 // pred_check_branch
        %157 = sbr.rel (%p154) target = $region28
      $region27: #{tpu_custom_call.1} parent=5 // pred_region
        %s158 = ssub.s32 %s12, 1
        // Predicated region
        $region29: #{tpu_custom_call.1} parent=27 // pred_check
          %p159 = pneg %p45
        $region30: #{tpu_custom_call.1} parent=27 // pred_check_branch
          %161 = sbr.rel (%p159) target = $region32
        $region31: #{tpu_custom_call.1} parent=27 // pred_region
          %162 = dma.done [#allocation3], 64
        $region32: #{tpu_custom_call.1} parent=27 // pred_fallthru
          _
        %s163 = sand.u32 %s60, 1
        %s164 = scalar_lea.sflag [#allocation5], %s163
        %s165 = sand.u32 %s60, 1
        %s166 = smul.addr %s165, 8
        %s167 = scalar_lea.vmem [#allocation4], %s166
        // Predicated region
        $region33: #{tpu_custom_call.1} parent=27 // pred_check
          %p168 = pneg %p73
        $region34: #{tpu_custom_call.1} parent=27 // pred_check_branch
          %170 = sbr.rel (%p168) target = $region36
        $region35: #{tpu_custom_call.1} parent=27 // pred_region
          %171 = dma.done %s164, 128
        $region36: #{tpu_custom_call.1} parent=27 // pred_fallthru
          _
        %p172 = pneg %p45
        %p173 = pneg %p42
        %s174 = sand.u32 %s60, 1
        %s175 = scalar_lea.sflag [#allocation5], %s174
        %s176 = sand.u32 %s60, 1
        %s177 = smul.addr %s176, 8
        %s178 = scalar_lea.vmem [#allocation4], %s177
        %p179 = pneg %p73
        %p180 = pneg %p70
        %p181 = pneg %p101
        %p182 = pneg %p98
        %p183 = scmp.lt.s32.totalorder %s21, 1
        %s184 = scalar_select %p183, %s21, 1
        %p185 = scmp.lt.s32.totalorder %s22, 0
        %s186 = scalar_select %p185, %s22, 0
        %s187 = smul.addr %s184, 2
        %s188 = sadd.s32 %s186, %s187
        %s189 = smul.addr %s188, 4
        %s190 = scalar_lea.vmem %s2, %s189
        %p191 = scmp.lt.s32.totalorder %s21, 1
        %s192 = scalar_select %p191, %s21, 1
        %p193 = scmp.lt.s32.totalorder %s22, 0
        %s194 = scalar_select %p193, %s22, 0
        %s195 = smul.addr %s192, 2
        %s196 = sadd.s32 %s194, %s195
        %s197 = smul.addr %s196, 4
        %s198 = scalar_lea.vmem %s2, %s197
        %v199 = vld [vmem:[%s167] sm:$0xff]
        %v200 = vld [vmem:[#allocation2] sm:$0x7]
        %202 = vset.pattern.permute.xlu0 0
        %203 = vperm.xlu0 %202, %v200
        %v204 = vpop.permute.xlu0 %203
        %v207 = vlaneseq
        %v208 = vshrl.u32 %v207, 7
        %v209 = vsub.s32 0, %v208
        %v210 = vrot.slane %v199, %v209
        %v211 = vlaneseq
        %v212 = vshrl.u32 %v211, 7
        %v213 = vsub.s32 4, %v212
        %v214 = vrot.slane %v199, %v213
        %v217 = vlaneseq
        %v218 = vshrl.u32 %v217, 7
        %v219 = vsub.s32 0, %v218
        %v220 = vrot.slane %v210, %v219
        %v221 = vlaneseq
        %v222 = vshrl.u32 %v221, 7
        %v223 = vsub.s32 0, %v222
        %v224 = vrot.slane %v214, %v223
        %v225 = vmul.f32 %v204, %v220
        %v226 = vmul.f32 %v204, %v224
        %v227 = vadd.f32 %v225, 0.0
        %v228 = vadd.f32 %v226, 0.0
        %229 = vset.pattern.permute.xlu0 1
        %230 = vperm.xlu0 %229, %v200
        %v231 = vpop.permute.xlu0 %230
        %v233 = vlaneseq
        %v234 = vshrl.u32 %v233, 7
        %v235 = vsub.s32 1, %v234
        %v236 = vrot.slane %v199, %v235
        %v237 = vlaneseq
        %v238 = vshrl.u32 %v237, 7
        %v239 = vsub.s32 5, %v238
        %v240 = vrot.slane %v199, %v239
        %v243 = vlaneseq
        %v244 = vshrl.u32 %v243, 7
        %v245 = vsub.s32 1, %v244
        %v246 = vrot.slane %v236, %v245
        %v247 = vlaneseq
        %v248 = vshrl.u32 %v247, 7
        %v249 = vsub.s32 1, %v248
        %v250 = vrot.slane %v240, %v249
        %v251 = vmul.f32 %v231, %v246
        %v252 = vmul.f32 %v231, %v250
        %v253 = vadd.f32 %v227, %v251
        %v254 = vadd.f32 %v228, %v252
        %255 = vset.pattern.permute.xlu0 2
        %256 = vperm.xlu0 %255, %v200
        %v257 = vpop.permute.xlu0 %256
        %v259 = vlaneseq
        %v260 = vshrl.u32 %v259, 7
        %v261 = vsub.s32 2, %v260
        %v262 = vrot.slane %v199, %v261
        %v263 = vlaneseq
        %v264 = vshrl.u32 %v263, 7
        %v265 = vsub.s32 6, %v264
        %v266 = vrot.slane %v199, %v265
        %v269 = vlaneseq
        %v270 = vshrl.u32 %v269, 7
        %v271 = vsub.s32 2, %v270
        %v272 = vrot.slane %v262, %v271
        %v273 = vlaneseq
        %v274 = vshrl.u32 %v273, 7
        %v275 = vsub.s32 2, %v274
        %v276 = vrot.slane %v266, %v275
        %v277 = vmul.f32 %v257, %v272
        %v278 = vmul.f32 %v257, %v276
        %v279 = vadd.f32 %v253, %v277
        %v280 = vadd.f32 %v254, %v278
        %281 = vset.pattern.permute.xlu0 3
        %282 = vperm.xlu0 %281, %v200
        %v283 = vpop.permute.xlu0 %282
        %v285 = vlaneseq
        %v286 = vshrl.u32 %v285, 7
        %v287 = vsub.s32 3, %v286
        %v288 = vrot.slane %v199, %v287
        %v289 = vlaneseq
        %v290 = vshrl.u32 %v289, 7
        %v291 = vsub.s32 7, %v290
        %v292 = vrot.slane %v199, %v291
        %v295 = vlaneseq
        %v296 = vshrl.u32 %v295, 7
        %v297 = vsub.s32 3, %v296
        %v298 = vrot.slane %v288, %v297
        %v299 = vlaneseq
        %v300 = vshrl.u32 %v299, 7
        %v301 = vsub.s32 3, %v300
        %v302 = vrot.slane %v292, %v301
        %v303 = vmul.f32 %v283, %v298
        %v304 = vmul.f32 %v283, %v302
        %v305 = vadd.f32 %v279, %v303
        %v306 = vadd.f32 %v280, %v304
        %307 = vset.pattern.permute.xlu0 4
        %308 = vperm.xlu0 %307, %v200
        %v309 = vpop.permute.xlu0 %308
        %v311 = vmul.f32 %v309, %v220
        %v312 = vmul.f32 %v309, %v224
        %315 = vrot.lane.b32.xlu0 %v311, 1
        %v316 = vpop.permute.xlu0 %315
        %317 = vrot.lane.b32.xlu0 %v312, 1
        %v318 = vpop.permute.xlu0 %317
        %vm319 = vcmask 7168
        %v320 = vsel %vm319, %v316, %v318
        %v323 = vadd.f32 %v305, %v316
        %v324 = vadd.f32 %v306, %v320
        %325 = vset.pattern.permute.xlu0 5
        %326 = vperm.xlu0 %325, %v200
        %v327 = vpop.permute.xlu0 %326
        %v329 = vmul.f32 %v327, %v246
        %v330 = vmul.f32 %v327, %v250
        %333 = vrot.lane.b32.xlu0 %v329, 1
        %v334 = vpop.permute.xlu0 %333
        %335 = vrot.lane.b32.xlu0 %v330, 1
        %v336 = vpop.permute.xlu0 %335
        %v337 = vsel %vm319, %v334, %v336
        %v340 = vadd.f32 %v323, %v334
        %v341 = vadd.f32 %v324, %v337
        %342 = vset.pattern.permute.xlu0 6
        %343 = vperm.xlu0 %342, %v200
        %v344 = vpop.permute.xlu0 %343
        %v346 = vmul.f32 %v344, %v272
        %v347 = vmul.f32 %v344, %v276
        %350 = vrot.lane.b32.xlu0 %v346, 1
        %v351 = vpop.permute.xlu0 %350
        %352 = vrot.lane.b32.xlu0 %v347, 1
        %v353 = vpop.permute.xlu0 %352
        %v354 = vsel %vm319, %v351, %v353
        %v357 = vadd.f32 %v340, %v351
        %v358 = vadd.f32 %v341, %v354
        %359 = vset.pattern.permute.xlu0 7
        %360 = vperm.xlu0 %359, %v200
        %v361 = vpop.permute.xlu0 %360
        %v363 = vmul.f32 %v361, %v298
        %v364 = vmul.f32 %v361, %v302
        %367 = vrot.lane.b32.xlu0 %v363, 1
        %v368 = vpop.permute.xlu0 %367
        %369 = vrot.lane.b32.xlu0 %v364, 1
        %v370 = vpop.permute.xlu0 %369
        %v371 = vsel %vm319, %v368, %v370
        %v374 = vadd.f32 %v357, %v368
        %v375 = vadd.f32 %v358, %v371
        %376 = vset.pattern.permute.xlu0 8
        %377 = vperm.xlu0 %376, %v200
        %v378 = vpop.permute.xlu0 %377
        %v380 = vmul.f32 %v378, %v220
        %v381 = vmul.f32 %v378, %v224
        %384 = vrot.lane.b32.xlu0 %v380, 2
        %v385 = vpop.permute.xlu0 %384
        %386 = vrot.lane.b32.xlu0 %v381, 2
        %v387 = vpop.permute.xlu0 %386
        %vm388 = vcmask 15360
        %v389 = vsel %vm388, %v385, %v387
        %v392 = vadd.f32 %v374, %v385
        %v393 = vadd.f32 %v375, %v389
        %394 = vset.pattern.permute.xlu0 9
        %395 = vperm.xlu0 %394, %v200
        %v396 = vpop.permute.xlu0 %395
        %v398 = vmul.f32 %v396, %v246
        %v399 = vmul.f32 %v396, %v250
        %402 = vrot.lane.b32.xlu0 %v398, 2
        %v403 = vpop.permute.xlu0 %402
        %404 = vrot.lane.b32.xlu0 %v399, 2
        %v405 = vpop.permute.xlu0 %404
        %v406 = vsel %vm388, %v403, %v405
        %v409 = vadd.f32 %v392, %v403
        %v410 = vadd.f32 %v393, %v406
        %411 = vset.pattern.permute.xlu0 10
        %412 = vperm.xlu0 %411, %v200
        %v413 = vpop.permute.xlu0 %412
        %v415 = vmul.f32 %v413, %v272
        %v416 = vmul.f32 %v413, %v276
        %419 = vrot.lane.b32.xlu0 %v415, 2
        %v420 = vpop.permute.xlu0 %419
        %421 = vrot.lane.b32.xlu0 %v416, 2
        %v422 = vpop.permute.xlu0 %421
        %v423 = vsel %vm388, %v420, %v422
        %v426 = vadd.f32 %v409, %v420
        %v427 = vadd.f32 %v410, %v423
        %428 = vset.pattern.permute.xlu0 11
        %429 = vperm.xlu0 %428, %v200
        %v430 = vpop.permute.xlu0 %429
        %v432 = vmul.f32 %v430, %v298
        %v433 = vmul.f32 %v430, %v302
        %436 = vrot.lane.b32.xlu0 %v432, 2
        %v437 = vpop.permute.xlu0 %436
        %438 = vrot.lane.b32.xlu0 %v433, 2
        %v439 = vpop.permute.xlu0 %438
        %v440 = vsel %vm388, %v437, %v439
        %v443 = vadd.f32 %v426, %v437
        %v444 = vadd.f32 %v427, %v440
        %445 = vset.pattern.permute.xlu0 12
        %446 = vperm.xlu0 %445, %v200
        %v447 = vpop.permute.xlu0 %446
        %v449 = vmul.f32 %v447, %v220
        %v450 = vmul.f32 %v447, %v224
        %453 = vrot.lane.b32.xlu0 %v449, 3
        %v454 = vpop.permute.xlu0 %453
        %455 = vrot.lane.b32.xlu0 %v450, 3
        %v456 = vpop.permute.xlu0 %455
        %vm457 = vcmask 23552
        %v458 = vsel %vm457, %v454, %v456
        %v461 = vadd.f32 %v443, %v454
        %v462 = vadd.f32 %v444, %v458
        %463 = vset.pattern.permute.xlu0 13
        %464 = vperm.xlu0 %463, %v200
        %v465 = vpop.permute.xlu0 %464
        %v467 = vmul.f32 %v465, %v246
        %v468 = vmul.f32 %v465, %v250
        %471 = vrot.lane.b32.xlu0 %v467, 3
        %v472 = vpop.permute.xlu0 %471
        %473 = vrot.lane.b32.xlu0 %v468, 3
        %v474 = vpop.permute.xlu0 %473
        %v475 = vsel %vm457, %v472, %v474
        %v478 = vadd.f32 %v461, %v472
        %v479 = vadd.f32 %v462, %v475
        %480 = vset.pattern.permute.xlu0 14
        %481 = vperm.xlu0 %480, %v200
        %v482 = vpop.permute.xlu0 %481
        %v484 = vmul.f32 %v482, %v272
        %v485 = vmul.f32 %v482, %v276
        %488 = vrot.lane.b32.xlu0 %v484, 3
        %v489 = vpop.permute.xlu0 %488
        %490 = vrot.lane.b32.xlu0 %v485, 3
        %v491 = vpop.permute.xlu0 %490
        %v492 = vsel %vm457, %v489, %v491
        %v495 = vadd.f32 %v478, %v489
        %v496 = vadd.f32 %v479, %v492
        %497 = vset.pattern.permute.xlu0 15
        %498 = vperm.xlu0 %497, %v200
        %v499 = vpop.permute.xlu0 %498
        %v501 = vmul.f32 %v499, %v298
        %v502 = vmul.f32 %v499, %v302
        %505 = vrot.lane.b32.xlu0 %v501, 3
        %v506 = vpop.permute.xlu0 %505
        %507 = vrot.lane.b32.xlu0 %v502, 3
        %v508 = vpop.permute.xlu0 %507
        %v509 = vsel %vm457, %v506, %v508
        %v512 = vadd.f32 %v495, %v506
        %v513 = vadd.f32 %v496, %v509
        %516 = vrot.lane.b32.xlu0 %v512, 124
        %v517 = vpop.permute.xlu0 %516
        %518 = vrot.lane.b32.xlu0 %v513, 124
        %v519 = vpop.permute.xlu0 %518
        %vm520 = vcmask 1014784
        %v521 = vsel %vm520, %v517, %v519
        %523 = vst [vmem:[%s198] sm:$0x7] %v521
        %v524 = vld [vmem:[%s167] sm:$0xff]
        %v525 = vld [vmem:[#allocation2] sm:$0x7]
        %527 = vset.pattern.permute.xlu0 20
        %528 = vperm.xlu0 %527, %v525
        %v529 = vpop.permute.xlu0 %528
        %v532 = vlaneseq
        %v533 = vshrl.u32 %v532, 7
        %v534 = vsub.s32 0, %v533
        %v535 = vrot.slane %v524, %v534
        %v536 = vlaneseq
        %v537 = vshrl.u32 %v536, 7
        %v538 = vsub.s32 4, %v537
        %v539 = vrot.slane %v524, %v538
        %v542 = vlaneseq
        %v543 = vshrl.u32 %v542, 7
        %v544 = vsub.s32 0, %v543
        %v545 = vrot.slane %v535, %v544
        %v546 = vlaneseq
        %v547 = vshrl.u32 %v546, 7
        %v548 = vsub.s32 0, %v547
        %v549 = vrot.slane %v539, %v548
        %v550 = vmul.f32 %v529, %v545
        %v551 = vmul.f32 %v529, %v549
        %v552 = vadd.f32 %v550, 0.0
        %v553 = vadd.f32 %v551, 0.0
        %554 = vset.pattern.permute.xlu0 21
        %555 = vperm.xlu0 %554, %v525
        %v556 = vpop.permute.xlu0 %555
        %v558 = vlaneseq
        %v559 = vshrl.u32 %v558, 7
        %v560 = vsub.s32 1, %v559
        %v561 = vrot.slane %v524, %v560
        %v562 = vlaneseq
        %v563 = vshrl.u32 %v562, 7
        %v564 = vsub.s32 5, %v563
        %v565 = vrot.slane %v524, %v564
        %v568 = vlaneseq
        %v569 = vshrl.u32 %v568, 7
        %v570 = vsub.s32 1, %v569
        %v571 = vrot.slane %v561, %v570
        %v572 = vlaneseq
        %v573 = vshrl.u32 %v572, 7
        %v574 = vsub.s32 1, %v573
        %v575 = vrot.slane %v565, %v574
        %v576 = vmul.f32 %v556, %v571
        %v577 = vmul.f32 %v556, %v575
        %v578 = vadd.f32 %v552, %v576
        %v579 = vadd.f32 %v553, %v577
        %580 = vset.pattern.permute.xlu0 22
        %581 = vperm.xlu0 %580, %v525
        %v582 = vpop.permute.xlu0 %581
        %v584 = vlaneseq
        %v585 = vshrl.u32 %v584, 7
        %v586 = vsub.s32 2, %v585
        %v587 = vrot.slane %v524, %v586
        %v588 = vlaneseq
        %v589 = vshrl.u32 %v588, 7
        %v590 = vsub.s32 6, %v589
        %v591 = vrot.slane %v524, %v590
        %v594 = vlaneseq
        %v595 = vshrl.u32 %v594, 7
        %v596 = vsub.s32 2, %v595
        %v597 = vrot.slane %v587, %v596
        %v598 = vlaneseq
        %v599 = vshrl.u32 %v598, 7
        %v600 = vsub.s32 2, %v599
        %v601 = vrot.slane %v591, %v600
        %v602 = vmul.f32 %v582, %v597
        %v603 = vmul.f32 %v582, %v601
        %v604 = vadd.f32 %v578, %v602
        %v605 = vadd.f32 %v579, %v603
        %606 = vset.pattern.permute.xlu0 23
        %607 = vperm.xlu0 %606, %v525
        %v608 = vpop.permute.xlu0 %607
        %v610 = vlaneseq
        %v611 = vshrl.u32 %v610, 7
        %v612 = vsub.s32 3, %v611
        %v613 = vrot.slane %v524, %v612
        %v614 = vlaneseq
        %v615 = vshrl.u32 %v614, 7
        %v616 = vsub.s32 7, %v615
        %v617 = vrot.slane %v524, %v616
        %v620 = vlaneseq
        %v621 = vshrl.u32 %v620, 7
        %v622 = vsub.s32 3, %v621
        %v623 = vrot.slane %v613, %v622
        %v624 = vlaneseq
        %v625 = vshrl.u32 %v624, 7
        %v626 = vsub.s32 3, %v625
        %v627 = vrot.slane %v617, %v626
        %v628 = vmul.f32 %v608, %v623
        %v629 = vmul.f32 %v608, %v627
        %v630 = vadd.f32 %v604, %v628
        %v631 = vadd.f32 %v605, %v629
        %632 = vset.pattern.permute.xlu0 24
        %633 = vperm.xlu0 %632, %v525
        %v634 = vpop.permute.xlu0 %633
        %v636 = vmul.f32 %v634, %v545
        %v637 = vmul.f32 %v634, %v549
        %640 = vrot.lane.b32.xlu0 %v636, 1
        %v641 = vpop.permute.xlu0 %640
        %642 = vrot.lane.b32.xlu0 %v637, 1
        %v643 = vpop.permute.xlu0 %642
        %v644 = vsel %vm319, %v641, %v643
        %v647 = vadd.f32 %v630, %v641
        %v648 = vadd.f32 %v631, %v644
        %649 = vset.pattern.permute.xlu0 25
        %650 = vperm.xlu0 %649, %v525
        %v651 = vpop.permute.xlu0 %650
        %v653 = vmul.f32 %v651, %v571
        %v654 = vmul.f32 %v651, %v575
        %657 = vrot.lane.b32.xlu0 %v653, 1
        %v658 = vpop.permute.xlu0 %657
        %659 = vrot.lane.b32.xlu0 %v654, 1
        %v660 = vpop.permute.xlu0 %659
        %v661 = vsel %vm319, %v658, %v660
        %v664 = vadd.f32 %v647, %v658
        %v665 = vadd.f32 %v648, %v661
        %666 = vset.pattern.permute.xlu0 26
        %667 = vperm.xlu0 %666, %v525
        %v668 = vpop.permute.xlu0 %667
        %v670 = vmul.f32 %v668, %v597
        %v671 = vmul.f32 %v668, %v601
        %674 = vrot.lane.b32.xlu0 %v670, 1
        %v675 = vpop.permute.xlu0 %674
        %676 = vrot.lane.b32.xlu0 %v671, 1
        %v677 = vpop.permute.xlu0 %676
        %v678 = vsel %vm319, %v675, %v677
        %v681 = vadd.f32 %v664, %v675
        %v682 = vadd.f32 %v665, %v678
        %683 = vset.pattern.permute.xlu0 27
        %684 = vperm.xlu0 %683, %v525
        %v685 = vpop.permute.xlu0 %684
        %v687 = vmul.f32 %v685, %v623
        %v688 = vmul.f32 %v685, %v627
        %691 = vrot.lane.b32.xlu0 %v687, 1
        %v692 = vpop.permute.xlu0 %691
        %693 = vrot.lane.b32.xlu0 %v688, 1
        %v694 = vpop.permute.xlu0 %693
        %v695 = vsel %vm319, %v692, %v694
        %v698 = vadd.f32 %v681, %v692
        %v699 = vadd.f32 %v682, %v695
        %700 = vset.pattern.permute.xlu0 28
        %701 = vperm.xlu0 %700, %v525
        %v702 = vpop.permute.xlu0 %701
        %v704 = vmul.f32 %v702, %v545
        %v705 = vmul.f32 %v702, %v549
        %708 = vrot.lane.b32.xlu0 %v704, 2
        %v709 = vpop.permute.xlu0 %708
        %710 = vrot.lane.b32.xlu0 %v705, 2
        %v711 = vpop.permute.xlu0 %710
        %v712 = vsel %vm388, %v709, %v711
        %v715 = vadd.f32 %v698, %v709
        %v716 = vadd.f32 %v699, %v712
        %717 = vset.pattern.permute.xlu0 29
        %718 = vperm.xlu0 %717, %v525
        %v719 = vpop.permute.xlu0 %718
        %v721 = vmul.f32 %v719, %v571
        %v722 = vmul.f32 %v719, %v575
        %725 = vrot.lane.b32.xlu0 %v721, 2
        %v726 = vpop.permute.xlu0 %725
        %727 = vrot.lane.b32.xlu0 %v722, 2
        %v728 = vpop.permute.xlu0 %727
        %v729 = vsel %vm388, %v726, %v728
        %v732 = vadd.f32 %v715, %v726
        %v733 = vadd.f32 %v716, %v729
        %734 = vset.pattern.permute.xlu0 30
        %735 = vperm.xlu0 %734, %v525
        %v736 = vpop.permute.xlu0 %735
        %v738 = vmul.f32 %v736, %v597
        %v739 = vmul.f32 %v736, %v601
        %742 = vrot.lane.b32.xlu0 %v738, 2
        %v743 = vpop.permute.xlu0 %742
        %744 = vrot.lane.b32.xlu0 %v739, 2
        %v745 = vpop.permute.xlu0 %744
        %v746 = vsel %vm388, %v743, %v745
        %v749 = vadd.f32 %v732, %v743
        %v750 = vadd.f32 %v733, %v746
        %751 = vset.pattern.permute.xlu0 31
        %752 = vperm.xlu0 %751, %v525
        %v753 = vpop.permute.xlu0 %752
        %v755 = vmul.f32 %v753, %v623
        %v756 = vmul.f32 %v753, %v627
        %759 = vrot.lane.b32.xlu0 %v755, 2
        %v760 = vpop.permute.xlu0 %759
        %761 = vrot.lane.b32.xlu0 %v756, 2
        %v762 = vpop.permute.xlu0 %761
        %v763 = vsel %vm388, %v760, %v762
        %v766 = vadd.f32 %v749, %v760
        %v767 = vadd.f32 %v750, %v763
        %768 = vset.pattern.permute.xlu0 32
        %769 = vperm.xlu0 %768, %v525
        %v770 = vpop.permute.xlu0 %769
        %v772 = vmul.f32 %v770, %v545
        %v773 = vmul.f32 %v770, %v549
        %776 = vrot.lane.b32.xlu0 %v772, 3
        %v777 = vpop.permute.xlu0 %776
        %778 = vrot.lane.b32.xlu0 %v773, 3
        %v779 = vpop.permute.xlu0 %778
        %v780 = vsel %vm457, %v777, %v779
        %v783 = vadd.f32 %v766, %v777
        %v784 = vadd.f32 %v767, %v780
        %785 = vset.pattern.permute.xlu0 33
        %786 = vperm.xlu0 %785, %v525
        %v787 = vpop.permute.xlu0 %786
        %v789 = vmul.f32 %v787, %v571
        %v790 = vmul.f32 %v787, %v575
        %793 = vrot.lane.b32.xlu0 %v789, 3
        %v794 = vpop.permute.xlu0 %793
        %795 = vrot.lane.b32.xlu0 %v790, 3
        %v796 = vpop.permute.xlu0 %795
        %v797 = vsel %vm457, %v794, %v796
        %v800 = vadd.f32 %v783, %v794
        %v801 = vadd.f32 %v784, %v797
        %802 = vset.pattern.permute.xlu0 34
        %803 = vperm.xlu0 %802, %v525
        %v804 = vpop.permute.xlu0 %803
        %v806 = vmul.f32 %v804, %v597
        %v807 = vmul.f32 %v804, %v601
        %810 = vrot.lane.b32.xlu0 %v806, 3
        %v811 = vpop.permute.xlu0 %810
        %812 = vrot.lane.b32.xlu0 %v807, 3
        %v813 = vpop.permute.xlu0 %812
        %v814 = vsel %vm457, %v811, %v813
        %v817 = vadd.f32 %v800, %v811
        %v818 = vadd.f32 %v801, %v814
        %819 = vset.pattern.permute.xlu0 35
        %820 = vperm.xlu0 %819, %v525
        %v821 = vpop.permute.xlu0 %820
        %v823 = vmul.f32 %v821, %v623
        %v824 = vmul.f32 %v821, %v627
        %827 = vrot.lane.b32.xlu0 %v823, 3
        %v828 = vpop.permute.xlu0 %827
        %829 = vrot.lane.b32.xlu0 %v824, 3
        %v830 = vpop.permute.xlu0 %829
        %v831 = vsel %vm457, %v828, %v830
        %v834 = vadd.f32 %v817, %v828
        %v835 = vadd.f32 %v818, %v831
        %836 = vset.pattern.permute.xlu0 36
        %837 = vperm.xlu0 %836, %v525
        %v838 = vpop.permute.xlu0 %837
        %v840 = vmul.f32 %v838, %v545
        %v841 = vmul.f32 %v838, %v549
        %844 = vrot.lane.b32.xlu0 %v840, 4
        %v845 = vpop.permute.xlu0 %844
        %846 = vrot.lane.b32.xlu0 %v841, 4
        %v847 = vpop.permute.xlu0 %846
        %vm848 = vcmask 31744
        %v849 = vsel %vm848, %v845, %v847
        %v852 = vadd.f32 %v834, %v845
        %v853 = vadd.f32 %v835, %v849
        %854 = vset.pattern.permute.xlu0 37
        %855 = vperm.xlu0 %854, %v525
        %v856 = vpop.permute.xlu0 %855
        %v858 = vmul.f32 %v856, %v571
        %v859 = vmul.f32 %v856, %v575
        %862 = vrot.lane.b32.xlu0 %v858, 4
        %v863 = vpop.permute.xlu0 %862
        %864 = vrot.lane.b32.xlu0 %v859, 4
        %v865 = vpop.permute.xlu0 %864
        %v866 = vsel %vm848, %v863, %v865
        %v869 = vadd.f32 %v852, %v863
        %v870 = vadd.f32 %v853, %v866
        %871 = vset.pattern.permute.xlu0 38
        %872 = vperm.xlu0 %871, %v525
        %v873 = vpop.permute.xlu0 %872
        %v875 = vmul.f32 %v873, %v597
        %v876 = vmul.f32 %v873, %v601
        %879 = vrot.lane.b32.xlu0 %v875, 4
        %v880 = vpop.permute.xlu0 %879
        %881 = vrot.lane.b32.xlu0 %v876, 4
        %v882 = vpop.permute.xlu0 %881
        %v883 = vsel %vm848, %v880, %v882
        %v886 = vadd.f32 %v869, %v880
        %v887 = vadd.f32 %v870, %v883
        %888 = vset.pattern.permute.xlu0 39
        %889 = vperm.xlu0 %888, %v525
        %v890 = vpop.permute.xlu0 %889
        %v892 = vmul.f32 %v890, %v623
        %v893 = vmul.f32 %v890, %v627
        %896 = vrot.lane.b32.xlu0 %v892, 4
        %v897 = vpop.permute.xlu0 %896
        %898 = vrot.lane.b32.xlu0 %v893, 4
        %v899 = vpop.permute.xlu0 %898
        %v900 = vsel %vm848, %v897, %v899
        %v903 = vadd.f32 %v886, %v897
        %v904 = vadd.f32 %v887, %v900
        %907 = vrot.lane.b32.xlu0 %v903, 123
        %v908 = vpop.permute.xlu0 %907
        %909 = vrot.lane.b32.xlu0 %v904, 123
        %v910 = vpop.permute.xlu0 %909
        %vm911 = vcmask 1006592
        %v912 = vsel %vm911, %v908, %v910
        %s914 = scalar_lea.vmem %s198, 4
        %915 = vst [vmem:[%s914] sm:$0x7] %v912
        %p916 = scmp.lt.s32.totalorder %s21, 1
        %s917 = scalar_select %p916, %s21, 1
        %p918 = scmp.lt.s32.totalorder %s22, 0
        %s919 = scalar_select %p918, %s22, 0
        %s920 = smul.addr %s917, 2
        %s921 = sadd.s32 %s919, %s920
        %s922 = smul.addr %s921, 4
        %s923 = scalar_lea.vmem %s2, %s922
        // Predicated region
        $region37: #{tpu_custom_call.1} parent=27 // pred_check
          %p924 = pneg %p98
        $region38: #{tpu_custom_call.1} parent=27 // pred_check_branch
          %926 = sbr.rel (%p924) target = $region40
        $region39: #{tpu_custom_call.1} parent=27 // pred_region
          _
        $region40: #{tpu_custom_call.1} parent=27 // pred_fallthru
          _
      $region28: #{tpu_custom_call.1} parent=5 // pred_fallthru
        _
      %p927 = scmp.le.s32.totalorder 2, %s12
      // Predicated region
      $region41: #{tpu_custom_call.1} parent=5 // pred_check
        %p928 = pneg %p927
      $region42: #{tpu_custom_call.1} parent=5 // pred_check_branch
        %930 = sbr.rel (%p928) target = $region44
      $region43: #{tpu_custom_call.1} parent=5 // pred_region
        %s931 = ssub.s32 %s12, 2
        // Predicated region
        $region45: #{tpu_custom_call.1} parent=43 // pred_check
          %p932 = pneg %p104
        $region46: #{tpu_custom_call.1} parent=43 // pred_check_branch
          %934 = sbr.rel (%p932) target = $region48
        $region47: #{tpu_custom_call.1} parent=43 // pred_region
          %p935 = scmp.lt.s32.totalorder %s23, 1
          %s936 = scalar_select %p935, %s23, 1
          %p937 = scmp.lt.s32.totalorder %s24, 0
          %s938 = scalar_select %p937, %s24, 0
          %s939 = smul.addr %s936, 2
          %s940 = sadd.s32 %s938, %s939
          %s941 = smul.addr %s940, 4
          %s942 = scalar_lea.vmem %s2, %s941
        $region48: #{tpu_custom_call.1} parent=43 // pred_fallthru
          _
      $region44: #{tpu_custom_call.1} parent=5 // pred_fallthru
        _
    $region6: #{tpu_custom_call.1} parent=1 // loop_footer
      %s16 = sadd.s32 1, %s12
    $region7: #{tpu_custom_call.1} parent=1 // loop_footer_branch
      %11 = sbr.rel target = $region3
    $region8: #{tpu_custom_call.1} parent=1 // loop_exit
      _
    %943 = vsyncpa [#allocation3], 1
    %s944 = scalar_lea.sflag [#allocation3], 1
    %945 = vsyncpa %s944, 1
    %946 = vsyncpa [#allocation5], 1
    %s947 = scalar_lea.sflag [#allocation5], 1
    %948 = vsyncpa %s947, 1

</llo_original>
